<compile_context>
chip_gen: v6e
topology: v6e:2x2x1
jax: 0.10.0
libtpu: 0.0.40
codegen_flags: <defaults>
</compile_context>

<pallas_src>
import functools

import jax
import jax.numpy as jnp
from jax.experimental import pallas as pl
from jax.experimental.pallas import tpu as pltpu


def _heatmap_loss_kernel(pred_ref, gt_ref, mask_ref, out_ref, *, inv_denom):
    j = pl.program_id(1)  # HW (reduction) axis, last in grid

    @pl.when(j == 0)
    def _():
        out_ref[...] = jnp.zeros_like(out_ref)

    # Upcast inside the kernel (mandatory on v5e which has no bf16 VPU).
    d = pred_ref[...].astype(jnp.float32) - gt_ref[...].astype(jnp.float32)
    sq = d * d * mask_ref[...].astype(jnp.float32)   # mask (TB,1,THW) bcasts over C
    partial = jnp.sum(sq, axis=2)                    # (TB, C)
    # Scale by the *global* 1/(C*H*W) so any HW tiling stays exact.
    out_ref[...] += jnp.sum(partial, axis=1, keepdims=True) * inv_denom


def _pick_batch_tile(B, bytes_per_sample, target_bytes):
    # Divisors of B that keep the (TB, 1) output block Mosaic-friendly:
    # either the full batch, or a multiple of 8 sublanes.
    cands = [d for d in range(1, B + 1) if B % d == 0 and (d == B or d % 8 == 0)]
    fitting = [d for d in cands if d * bytes_per_sample <= target_bytes]
    return max(fitting) if fitting else min(cands)


def _pick_hw_tile(HW, per_hw_bytes, target_bytes):
    if HW * per_hw_bytes <= target_bytes:
        return HW
    # Lane-aligned divisors of HW only (keeps blocks (8,128)-friendly).
    cands = [t for t in range(128, HW, 128) if HW % t == 0]
    fitting = [t for t in cands if t * per_hw_bytes <= target_bytes]
    if fitting:
        return max(fitting)
    return min(cands) if cands else HW


def heatmap_loss(pred, gt, mask, *, target_block_bytes=2 * 1024 * 1024):
    """pred, gt: [B, C, H, W]; mask: [B, H, W]; returns [B] float32."""
    assert pred.shape == gt.shape
    B, C, H, W = pred.shape
    HW = H * W

    # Stream inputs in their native dtype; the kernel upcasts to f32.
    pred2 = pred.reshape(B, C, HW)
    gt2 = gt.reshape(B, C, HW)
    mask2 = mask.reshape(B, 1, HW)

    itemsize = max(pred2.dtype.itemsize, gt2.dtype.itemsize)
    TB = _pick_batch_tile(B, C * HW * itemsize, target_block_bytes)
    THW = _pick_hw_tile(HW, TB * C * itemsize, target_block_bytes)

    grid = (B // TB, HW // THW)
    inv_denom = 1.0 / float(C * H * W)

    kernel = functools.partial(_heatmap_loss_kernel, inv_denom=inv_denom)

    out = pl.pallas_call(
        kernel,
        out_shape=jax.ShapeDtypeStruct((B, 1), jnp.float32),
        grid_spec=pltpu.PrefetchScalarGridSpec(
            num_scalar_prefetch=0,
            grid=grid,
            in_specs=[
                pl.BlockSpec((TB, C, THW), lambda i, j: (i, 0, j)),
                pl.BlockSpec((TB, C, THW), lambda i, j: (i, 0, j)),
                pl.BlockSpec((TB, 1, THW), lambda i, j: (i, 0, j)),
            ],
            out_specs=pl.BlockSpec((TB, 1), lambda i, j: (i, 0)),
        ),
        compiler_params=pltpu.CompilerParams(
            dimension_semantics=("parallel", "arbitrary")),
    )(pred2, gt2, mask2)
    return out[:, 0]


if __name__ == "__main__":
    B, C, H, W = 2, 4, 16, 16
    key = jax.random.PRNGKey(0)
    k1, k2, k3 = jax.random.split(key, 3)

    pred = jax.random.normal(k1, (B, C, H, W), dtype=jnp.float32)
    gt = jax.random.normal(k2, (B, C, H, W), dtype=jnp.float32)
    # Binary mask (0./1.) like typical heatmap valid-region masks.
    mask = (jax.random.uniform(k3, (B, H, W)) > 0.3).astype(jnp.float32)

    loss = jax.block_until_ready(heatmap_loss(pred, gt, mask))

    # Pure-JAX reference (same math as the PyTorch module).
    ref = ((pred - gt) ** 2 * mask[:, None, :, :]).mean(axis=3).mean(axis=2).mean(axis=1)

    assert loss.shape == (B,)
    assert jnp.allclose(loss, ref, rtol=1e-5, atol=1e-6)
    print("KERNEL_OK")
</pallas_src>

<mosaic_0001>
module attributes {stable_mosaic.version = 11 : i64} {
  func.func @_heatmap_loss_kernel(%arg0: i32, %arg1: i32, %arg2: memref<2x4x256xf32, #tpu.memory_space<vmem>>, %arg3: memref<2x4x256xf32, #tpu.memory_space<vmem>>, %arg4: memref<2x1x256xf32, #tpu.memory_space<vmem>>, %arg5: memref<2x1xf32, #tpu.memory_space<vmem>>) attributes {dimension_semantics = [#tpu.dimension_semantics<parallel>, #tpu.dimension_semantics<arbitrary>], iteration_bounds = array<i64: 1, 1>, scalar_prefetch = 0 : i64, scratch_operands = 0 : i64, tpu.core_type = #tpu.core_type<tc>, window_params = [{transform_indices = @transform_0, window_bounds = array<i64: 2, 4, 256>}, {transform_indices = @transform_1, window_bounds = array<i64: 2, 4, 256>}, {transform_indices = @transform_2, window_bounds = array<i64: 2, 1, 256>}, {transform_indices = @transform_3, window_bounds = array<i64: 2, 1>}]} {
    %c0_i32 = arith.constant 0 : i32
    %0 = arith.cmpi eq, %arg1, %c0_i32 : i32
    %1 = arith.extui %0 : i1 to i32
    %c0_i32_0 = arith.constant 0 : i32
    %2 = arith.cmpi ne, %1, %c0_i32_0 : i32
    scf.if %2 {
      %cst_15 = arith.constant 0.000000e+00 : f32
      %18 = vector.broadcast %cst_15 : f32 to vector<2x1xf32>
      %c0_16 = arith.constant 0 : index
      %c0_17 = arith.constant 0 : index
      %19 = vector.load %arg5[%c0_16, %c0_17] : memref<2x1xf32, #tpu.memory_space<vmem>>, vector<2x1xf32>
      tpu.vector_store %arg5[%c0_16, %c0_17], %18 {strides = array<i32>} : memref<2x1xf32, #tpu.memory_space<vmem>>, vector<2x1xf32>,
    } else {
    }
    %c0 = arith.constant 0 : index
    %c0_1 = arith.constant 0 : index
    %c0_2 = arith.constant 0 : index
    %3 = vector.load %arg2[%c0, %c0_1, %c0_2] : memref<2x4x256xf32, #tpu.memory_space<vmem>>, vector<2x4x256xf32>
    %c0_3 = arith.constant 0 : index
    %c0_4 = arith.constant 0 : index
    %c0_5 = arith.constant 0 : index
    %4 = vector.load %arg3[%c0_3, %c0_4, %c0_5] : memref<2x4x256xf32, #tpu.memory_space<vmem>>, vector<2x4x256xf32>
    %5 = arith.subf %3, %4 : vector<2x4x256xf32>
    %6 = arith.mulf %5, %5 : vector<2x4x256xf32>
    %c0_6 = arith.constant 0 : index
    %c0_7 = arith.constant 0 : index
    %c0_8 = arith.constant 0 : index
    %7 = vector.load %arg4[%c0_6, %c0_7, %c0_8] : memref<2x1x256xf32, #tpu.memory_space<vmem>>, vector<2x1x256xf32>
    %8 = vector.broadcast %7 : vector<2x1x256xf32> to vector<2x4x256xf32>
    %9 = arith.mulf %6, %8 : vector<2x4x256xf32>
    %cst = arith.constant dense<0.000000e+00> : vector<2x4xf32>
    %10 = vector.multi_reduction <add>, %9, %cst [2] : vector<2x4x256xf32> to vector<2x4xf32>
    %c0_9 = arith.constant 0 : index
    %c0_10 = arith.constant 0 : index
    %11 = vector.load %arg5[%c0_9, %c0_10] : memref<2x1xf32, #tpu.memory_space<vmem>>, vector<2x1xf32>
    %cst_11 = arith.constant dense<0.000000e+00> : vector<2xf32>
    %12 = vector.multi_reduction <add>, %10, %cst_11 [1] : vector<2x4xf32> to vector<2xf32>
    %13 = vector.shape_cast %12 : vector<2xf32> to vector<2x1xf32>
    %cst_12 = arith.constant 9.765625E-4 : f32
    %14 = vector.broadcast %cst_12 : f32 to vector<2x1xf32>
    %15 = arith.mulf %13, %14 : vector<2x1xf32>
    %16 = arith.addf %11, %15 : vector<2x1xf32>
    %c0_13 = arith.constant 0 : index
    %c0_14 = arith.constant 0 : index
    %17 = vector.load %arg5[%c0_13, %c0_14] : memref<2x1xf32, #tpu.memory_space<vmem>>, vector<2x1xf32>
    tpu.vector_store %arg5[%c0_13, %c0_14], %16 {strides = array<i32>} : memref<2x1xf32, #tpu.memory_space<vmem>>, vector<2x1xf32>,
    return
  }
  func.func @transform_0(%arg0: i32, %arg1: i32) -> (i32, i32, i32) {
    %c0_i32 = arith.constant 0 : i32
    %c0_i32_0 = arith.constant 0 : i32
    return %arg0, %c0_i32, %arg1 : i32, i32, i32
  }
  func.func @transform_1(%arg0: i32, %arg1: i32) -> (i32, i32, i32) {
    %c0_i32 = arith.constant 0 : i32
    %c0_i32_0 = arith.constant 0 : i32
    return %arg0, %c0_i32, %arg1 : i32, i32, i32
  }
  func.func @transform_2(%arg0: i32, %arg1: i32) -> (i32, i32, i32) {
    %c0_i32 = arith.constant 0 : i32
    %c0_i32_0 = arith.constant 0 : i32
    return %arg0, %c0_i32, %arg1 : i32, i32, i32
  }
  func.func @transform_3(%arg0: i32, %arg1: i32) -> (i32, i32) {
    %c0_i32 = arith.constant 0 : i32
    %c0_i32_0 = arith.constant 0 : i32
    return %arg0, %c0_i32 : i32, i32
  }
}

</mosaic_0001>

<llo_original>
// kernel: tpu_custom_call.1
$region0: #{tpu_custom_call.1}
  #allocation0 [shape = 'u32[]', space=smem, size = 0x4, offset = 0x4, fixed_abs, tag = 'smem constant byte address 0x4 - core index']
  #allocation1 [shape = 'u32[144,128]{1,0:T(1,128)}', space=vmem, size = 0x12000, scoped, tag = 'internal scratch']
  %s0 = inlined_call_operand.hbm [shape: f32[2,4,256], index: 0, kind: input, shape index: {}]
  %s1 = inlined_call_operand.hbm [shape: f32[2,4,256], index: 1, kind: input, shape index: {}]
  %s2 = inlined_call_operand.hbm [shape: f32[2,1,256], index: 2, kind: input, shape index: {}]
  %s3 = inlined_call_operand.vmem [shape: f32[2,1], index: 3, kind: output, shape index: {}]
  %s4 = sld [smem:[#allocation0]]
  $region38: #{tpu_custom_call.1} parent=0
    _
  %s6 = ssub.s32 1, %s4
  %s7 = scalar_select 0, %s6, %s4
  $region1: #{tpu_custom_call.1} parent=0
    #allocation2 [shape = 'u8[8192]{0}', space=vmem, size = 0x2000, scoped, tag = 'input window, operand 0, single buffered']
    #allocation3 [shape = 's32[1]{0}', space=sflag, size = 0x4, scoped, tag = 'scoped memory for tpu_custom_call.1']
    #allocation4 [shape = 'u8[8192]{0}', space=vmem, size = 0x2000, scoped, tag = 'input window, operand 1, single buffered']
    #allocation5 [shape = 's32[1]{0}', space=sflag, size = 0x4, scoped, tag = 'scoped memory for tpu_custom_call.1']
    #allocation6 [shape = 'u8[2048]{0}', space=vmem, size = 0x800, scoped, tag = 'input window, operand 2, single buffered']
    %8 = vsyncpa [#allocation3], 0
    %9 = vsyncpa [#allocation5], 0
    // Predicated region
    $region2: #{tpu_custom_call.1} parent=1 // pred_check
      _
    $region3: #{tpu_custom_call.1} parent=1 // pred_check_branch
      %11 = sbr.rel (0) target = $region5
    $region4: #{tpu_custom_call.1} parent=1 // pred_region
      %s13 = ssub.s32 256, 256
      %14 = vsyncadd [#allocation3], %s13
      %s15 = sshll.u32 [#allocation2], 4
      %s16 = int_to_ptr.vmem [resolvable:$true] %s15
      %21 = dma.hbm_to_vmem [thread:$0]  %s0, 256, %s16, [#allocation3], 128, 128, 8
    $region5: #{tpu_custom_call.1} parent=1 // pred_fallthru
      _
    // Predicated region
    $region6: #{tpu_custom_call.1} parent=1 // pred_check
      _
    $region7: #{tpu_custom_call.1} parent=1 // pred_check_branch
      %23 = sbr.rel (0) target = $region9
    $region8: #{tpu_custom_call.1} parent=1 // pred_region
      %s25 = ssub.s32 256, 256
      %26 = vsyncadd [#allocation5], %s25
      %s27 = sshll.u32 [#allocation4], 4
      %s28 = int_to_ptr.vmem [resolvable:$true] %s27
      %33 = dma.hbm_to_vmem [thread:$0]  %s1, 256, %s28, [#allocation5], 128, 128, 8
    $region9: #{tpu_custom_call.1} parent=1 // pred_fallthru
      _
    // Predicated region
    $region10: #{tpu_custom_call.1} parent=1 // pred_check
      _
    $region11: #{tpu_custom_call.1} parent=1 // pred_check_branch
      %35 = sbr.rel (0) target = $region13
    $region12: #{tpu_custom_call.1} parent=1 // pred_region
      %s37 = ssub.s32 64, 64
      %38 = vsyncadd [#allocation5], %s37
      %s39 = sshll.u32 [#allocation6], 4
      %s40 = int_to_ptr.vmem [resolvable:$true] %s39
      %45 = dma.hbm_to_vmem [thread:$0]  %s2, 64, %s40, [#allocation5], 32, 32, 2
    $region13: #{tpu_custom_call.1} parent=1 // pred_fallthru
      _
    // Predicated region
    $region14: #{tpu_custom_call.1} parent=1 // pred_check
      _
    $region15: #{tpu_custom_call.1} parent=1 // pred_check_branch
      %47 = sbr.rel (0) target = $region17
    $region16: #{tpu_custom_call.1} parent=1 // pred_region
      %48 = dma.done [#allocation3], 256
    $region17: #{tpu_custom_call.1} parent=1 // pred_fallthru
      _
    // Predicated region
    $region18: #{tpu_custom_call.1} parent=1 // pred_check
      _
    $region19: #{tpu_custom_call.1} parent=1 // pred_check_branch
      %50 = sbr.rel (0) target = $region21
    $region20: #{tpu_custom_call.1} parent=1 // pred_region
      %51 = dma.done [#allocation5], 256
    $region21: #{tpu_custom_call.1} parent=1 // pred_fallthru
      _
    // Predicated region
    $region22: #{tpu_custom_call.1} parent=1 // pred_check
      _
    $region23: #{tpu_custom_call.1} parent=1 // pred_check_branch
      %53 = sbr.rel (0) target = $region25
    $region24: #{tpu_custom_call.1} parent=1 // pred_region
      %54 = dma.done [#allocation5], 64
    $region25: #{tpu_custom_call.1} parent=1 // pred_fallthru
      _
    %p55 = scmp.eq.s32.totalorder 0, 0
    // Predicated region
    $region26: #{tpu_custom_call.1} parent=1 // pred_check
      %p56 = pneg %p55
    $region27: #{tpu_custom_call.1} parent=1 // pred_check_branch
      %58 = sbr.rel (%p56) target = $region29
    $region28: #{tpu_custom_call.1} parent=1 // pred_region
      %vm59 = vcmask 1024
      %60 = vst.msk [vmem:[%s3] sm:$0x3] %vm59, 0.0
    $region29: #{tpu_custom_call.1} parent=1 // pred_fallthru
      _
    %v61 = vld [vmem:[#allocation2] sm:$0xff]
    %v62 = vld [vmem:[#allocation2 + $0x8] sm:$0xff]
    %v63 = vld [vmem:[#allocation4] sm:$0xff]
    %v64 = vld [vmem:[#allocation4 + $0x8] sm:$0xff]
    %v65 = vsub.f32 %v61, %v63
    %v66 = vsub.f32 %v62, %v64
    %v67 = vmul.f32 %v65, %v65
    %v68 = vmul.f32 %v66, %v66
    %v69 = vld [vmem:[#allocation6] sm:$0x3]
    %v70 = vld [vmem:[#allocation6 + $0x2] sm:$0x3]
    %v73 = vlaneseq
    %v74 = vshrl.u32 %v73, 7
    %v75 = vsub.s32 0, %v74
    %v76 = vrot.slane %v69, %v75
    %v77 = vlaneseq
    %v78 = vshrl.u32 %v77, 7
    %v79 = vsub.s32 1, %v78
    %v80 = vrot.slane %v69, %v79
    %v81 = vlaneseq
    %v82 = vshrl.u32 %v81, 7
    %v83 = vsub.s32 0, %v82
    %v84 = vrot.slane %v70, %v83
    %v85 = vlaneseq
    %v86 = vshrl.u32 %v85, 7
    %v87 = vsub.s32 1, %v86
    %v88 = vrot.slane %v70, %v87
    %v89 = vcombine.low %v76, %v80
    %v90 = vcombine.low %v84, %v88
    %v93 = vmul.f32 %v67, %v89
    %v94 = vmul.f32 %v68, %v90
    %v97 = vcombine.high %v93, %v93
    %v98 = vcombine.high %v94, %v94
    %vm101 = vcmask 1043456
    %v102 = vsel %vm101, %v93, 0.0
    %v103 = vsel %vm101, %v97, 0.0
    %v104 = vadd.f32 %v102, %v103
    %105 = vadd.xlane.f32.xlu0 %v104
    %v106 = vpop.xlane.xlu0 %105
    %v107 = vsel %vm101, %v94, 0.0
    %v108 = vsel %vm101, %v98, 0.0
    %v109 = vadd.f32 %v107, %v108
    %110 = vadd.xlane.f32.xlu0 %v109
    %v111 = vpop.xlane.xlu0 %110
    %v112 = vld [vmem:[%s3] sm:$0x3]
    %v115 = vlaneseq
    %v116 = vand.u32 %v115, 127
    %v117 = vlaneseq
    %v118 = vshrl.u32 %v117, 7
    %v119 = vsub.s32 %v116, %v118
    %v120 = vrot.slane %v106, %v119
    %v121 = vlaneseq
    %v122 = vshrl.u32 %v121, 7
    %v123 = vsub.s32 %v116, %v122
    %v124 = vrot.slane %v111, %v123
    %vm125 = vcmask 1041409
    %v126 = vsel %vm125, %v124, %v120
    %vm128 = vcmask 25600
    %v129 = vsel %vm128, %v126, 0.0
    %130 = vadd.xlane.f32.xlu0 %v129
    %v131 = vpop.xlane.xlu0 %130
    %v132 = vmul.f32 %v131, 0.0009765625
    %v133 = vadd.f32 %v112, %v132
    %vm134 = vcmask 1024
    %135 = vst.msk [vmem:[%s3] sm:$0x3] %vm134, %v133
    // Predicated region
    $region30: #{tpu_custom_call.1} parent=1 // pred_check
      _
    $region31: #{tpu_custom_call.1} parent=1 // pred_check_branch
      %137 = sbr.rel (0) target = $region33
    $region32: #{tpu_custom_call.1} parent=1 // pred_region
      _
    $region33: #{tpu_custom_call.1} parent=1 // pred_fallthru
      _
    // Predicated region
    $region34: #{tpu_custom_call.1} parent=1 // pred_check
      _
    $region35: #{tpu_custom_call.1} parent=1 // pred_check_branch
      %139 = sbr.rel (0) target = $region37
    $region36: #{tpu_custom_call.1} parent=1 // pred_region
      _
    $region37: #{tpu_custom_call.1} parent=1 // pred_fallthru
      _
    %140 = vsyncpa [#allocation3], 1
    %141 = vsyncpa [#allocation5], 1

</llo_original>
